<compile_context>
chip_gen: v6e
topology: v6e:2x2x1
jax: 0.10.0
libtpu: 0.0.40
codegen_flags: <defaults>
</compile_context>

<pallas_src>
import jax
import jax.numpy as jnp
from jax.experimental import pallas as pl
from jax.experimental.pallas import tpu as pltpu

_LANE = 128
_NEG_BIG = -1e30


def _round_up(x, m):
    return ((x + m - 1) // m) * m


# ----------------------------- kernels ------------------------------------ #
# Weights are pre-transposed to (in, out): contraction needs no in-kernel .T.

def _fc_kernel(x_ref, w1_ref, b1_ref, w2_ref, b2_ref, o_ref):
    # y = relu(x @ W1 + b1) @ W2 + b2
    x = x_ref[...]
    h = jnp.dot(x, w1_ref[...], preferred_element_type=jnp.float32) + b1_ref[...]
    h = jnp.maximum(h, 0.0)
    y = jnp.dot(h, w2_ref[...], preferred_element_type=jnp.float32) + b2_ref[...]
    o_ref[...] = y.astype(o_ref.dtype)


def _fc_sig_kernel(x_ref, w1_ref, b1_ref, w2_ref, b2_ref, o_ref):
    # y = (x @ W1 + b1) @ W2 + b2   (torch 'fc_sig' applies no sigmoid)
    x = x_ref[...]
    h = jnp.dot(x, w1_ref[...], preferred_element_type=jnp.float32) + b1_ref[...]
    y = jnp.dot(h, w2_ref[...], preferred_element_type=jnp.float32) + b2_ref[...]
    o_ref[...] = y.astype(o_ref.dtype)


def _fc_softmax_kernel(x_ref, w_ref, b_ref, o_ref):
    # y = softmax(x @ W + b, axis=-1). Padded columns carry a -1e30 bias so
    # their exp() is exactly 0 and the denominator stays correct.
    z = jnp.dot(x_ref[...], w_ref[...],
                preferred_element_type=jnp.float32) + b_ref[...]
    z = z - jnp.max(z, axis=-1, keepdims=True)
    p = jnp.exp(z)
    s = jnp.sum(p, axis=-1, keepdims=True)
    r = pl.reciprocal(s, approx=True)   # EUP slot (idle after the exp)
    r = r * (2.0 - s * r)               # one Newton step -> fp32 accuracy
    o_ref[...] = (p * r).astype(o_ref.dtype)


# ----------------------------- helpers ------------------------------------ #

def _torch_linear_init(key, in_features, out_features, dtype=jnp.float32):
    # torch.nn.Linear default: U(-1/sqrt(in), 1/sqrt(in)) for weight and bias.
    # Weight returned pre-transposed as (in, out) (distribution is symmetric).
    kw, kb = jax.random.split(key)
    bound = 1.0 / (in_features ** 0.5)
    w = jax.random.uniform(kw, (in_features, out_features), dtype,
                           minval=-bound, maxval=bound)
    b = jax.random.uniform(kb, (1, out_features), dtype,
                           minval=-bound, maxval=bound)
    return w, b


def _choose_batch_tile(n, d, c_pad):
    """Largest batch tile that fits a conservative VMEM budget.

    Budget of ~12 MiB of block data keeps us inside the v5e 16 MiB scoped
    default and well inside v6e/v7x defaults without raising vmem_limit_bytes.
    """
    budget = 12 << 20
    weight_bytes = (d * d + d + d * c_pad + c_pad) * 4          # single-buffered
    per_row = (2 * d + 2 * c_pad + d + c_pad) * 4               # dbl-buf x/out + f32 temps
    tb = max(8, (budget - weight_bytes) // per_row)
    tb = min(tb, 1024)
    if n <= tb:
        if n <= 256:
            return n                     # single full block (block == full dim is legal)
        tb = -(-n // 2)                  # >=2 grid steps -> use both TCs on v7x
    tb = min(_round_up(tb, 8), _round_up(n, 8))
    return tb


# ----------------------------- wrapper ------------------------------------ #

class ReadoutFunction:
    """JAX/Pallas port of the torch ReadoutFunction module."""

    def __init__(self, readout_def, args, *, key):
        self.r_definition = readout_def.lower()
        self.args = args
        d = args['readout_input_size']
        c = args['output_classes']
        self._c = c
        self._c_pad = _round_up(c, _LANE)    # lane-dense output width
        k1, k2 = jax.random.split(key)

        if self.r_definition in ('fc', 'fc_sig'):
            self._w1, self._b1 = _torch_linear_init(k1, d, d)
            self._w2, self._b2 = _torch_linear_init(k2, d, c)
            w2p = jnp.zeros((d, self._c_pad), self._w2.dtype).at[:, :c].set(self._w2)
            b2p = jnp.zeros((1, self._c_pad), self._b2.dtype).at[:, :c].set(self._b2)
            self._params = (self._w1, self._b1, w2p, b2p)
            self._kernel = _fc_kernel if self.r_definition == 'fc' else _fc_sig_kernel
        elif self.r_definition == 'fc_soft_max':
            self._w1, self._b1 = _torch_linear_init(k1, d, c)
            w1p = jnp.zeros((d, self._c_pad), self._w1.dtype).at[:, :c].set(self._w1)
            b1p = jnp.full((1, self._c_pad), _NEG_BIG,
                           self._b1.dtype).at[:, :c].set(self._b1)
            self._params = (w1p, b1p)
            self._kernel = _fc_softmax_kernel
        else:
            raise ValueError('Incorrect readout definition ' + readout_def)

    def get_definition(self):
        return self.r_definition

    def get_args(self):
        return self.args

    def __call__(self, h_v):
        return self.forward(h_v)

    def forward(self, h_v):
        n, d = h_v.shape
        c_pad = self._c_pad
        tb = _choose_batch_tile(n, d, c_pad)
        grid = (pl.cdiv(n, tb),)

        x_spec = pl.BlockSpec((tb, d), lambda i: (i, 0))
        out_spec = pl.BlockSpec((tb, c_pad), lambda i: (i, 0))

        def const_spec(shape):
            # Constant index_map: Pallas only re-issues a DMA when the block
            # index changes, so weights/biases are fetched into VMEM once.
            return pl.BlockSpec(shape, lambda i: (0, 0))

        in_specs = [x_spec] + [const_spec(p.shape) for p in self._params]

        out = pl.pallas_call(
            self._kernel,
            out_shape=jax.ShapeDtypeStruct((n, c_pad), h_v.dtype),
            grid_spec=pltpu.PrefetchScalarGridSpec(
                num_scalar_prefetch=0,
                grid=grid,
                in_specs=in_specs,
                out_specs=out_spec,
            ),
            compiler_params=pltpu.CompilerParams(
                dimension_semantics=("parallel",)),
        )(h_v, *self._params)
        return out[:, :self._c]


# --------------------------- pure-JAX reference ---------------------------- #

def _reference(readout, h_v):
    if readout.r_definition in ('fc', 'fc_sig'):
        h = h_v @ readout._w1 + readout._b1
        if readout.r_definition == 'fc':
            h = jnp.maximum(h, 0.0)
        return h @ readout._w2 + readout._b2
    z = h_v @ readout._w1 + readout._b1
    return jax.nn.softmax(z, axis=-1)


# --------------------------------- main ------------------------------------ #

if __name__ == "__main__":
    key = jax.random.PRNGKey(0)
    k_in, k_in2, k_fc, k_sm, k_sig = jax.random.split(key, 5)

    batch = 8
    readout_input_size = 32
    output_classes = 10
    args = {'readout_input_size': readout_input_size,
            'output_classes': output_classes}

    h_v = jax.random.normal(k_in, (batch, readout_input_size), jnp.float32)
    # Second input exercises the multi-step grid + ragged tail path.
    h_v_big = jax.random.normal(k_in2, (260, readout_input_size), jnp.float32)

    ok = True
    for name, k in (('fc', k_fc), ('fc_soft_max', k_sm), ('fc_sig', k_sig)):
        readout = ReadoutFunction(name, args, key=k)

        out = jax.block_until_ready(readout(h_v))
        ref = _reference(readout, h_v)
        if out.shape != (batch, output_classes):
            ok = False
        if not jnp.allclose(out, ref, atol=1e-5, rtol=1e-5):
            ok = False

        out_b = jax.block_until_ready(readout(h_v_big))
        ref_b = _reference(readout, h_v_big)
        if out_b.shape != (260, output_classes):
            ok = False
        if not jnp.allclose(out_b, ref_b, atol=1e-5, rtol=1e-5):
            ok = False

    if ok:
        print("KERNEL_OK")
</pallas_src>

<mosaic_0001>
module attributes {stable_mosaic.version = 11 : i64} {
  func.func @_fc_kernel(%arg0: i32, %arg1: memref<8x32xf32, #tpu.memory_space<vmem>>, %arg2: memref<32x32xf32, #tpu.memory_space<vmem>>, %arg3: memref<1x32xf32, #tpu.memory_space<vmem>>, %arg4: memref<32x128xf32, #tpu.memory_space<vmem>>, %arg5: memref<1x128xf32, #tpu.memory_space<vmem>>, %arg6: memref<8x128xf32, #tpu.memory_space<vmem>>) attributes {dimension_semantics = [#tpu.dimension_semantics<parallel>], iteration_bounds = array<i64: 1>, scalar_prefetch = 0 : i64, scratch_operands = 0 : i64, tpu.core_type = #tpu.core_type<tc>, window_params = [{transform_indices = @transform_0, window_bounds = array<i64: 8, 32>}, {pipeline_mode = #tpu.pipeline_mode<synchronous>, transform_indices = @transform_1, window_bounds = array<i64: 32, 32>}, {pipeline_mode = #tpu.pipeline_mode<synchronous>, transform_indices = @transform_2, window_bounds = array<i64: 1, 32>}, {pipeline_mode = #tpu.pipeline_mode<synchronous>, transform_indices = @transform_3, window_bounds = array<i64: 32, 128>}, {pipeline_mode = #tpu.pipeline_mode<synchronous>, transform_indices = @transform_4, window_bounds = array<i64: 1, 128>}, {transform_indices = @transform_5, window_bounds = array<i64: 8, 128>}]} {
    %c0 = arith.constant 0 : index
    %c0_0 = arith.constant 0 : index
    %0 = vector.load %arg1[%c0, %c0_0] : memref<8x32xf32, #tpu.memory_space<vmem>>, vector<8x32xf32>
    %c0_1 = arith.constant 0 : index
    %c0_2 = arith.constant 0 : index
    %1 = vector.load %arg2[%c0_1, %c0_2] : memref<32x32xf32, #tpu.memory_space<vmem>>, vector<32x32xf32>
    %cst = arith.constant dense<0.000000e+00> : vector<8x32xf32>
    %2 = tpu.matmul %0, %1, %cst {dimension_numbers = #tpu.dot_dimension_numbers<[1], [0], [0], [1], [0, 0, 1, 1], [], []>} : vector<8x32xf32>, vector<32x32xf32>, vector<8x32xf32> -> vector<8x32xf32>
    %c0_3 = arith.constant 0 : index
    %c0_4 = arith.constant 0 : index
    %3 = vector.load %arg3[%c0_3, %c0_4] : memref<1x32xf32, #tpu.memory_space<vmem>>, vector<1x32xf32>
    %4 = vector.broadcast %3 : vector<1x32xf32> to vector<8x32xf32>
    %5 = arith.addf %2, %4 : vector<8x32xf32>
    %cst_5 = arith.constant 0.000000e+00 : f32
    %6 = vector.broadcast %cst_5 : f32 to vector<8x32xf32>
    %7 = arith.maximumf %5, %6 : vector<8x32xf32>
    %c0_6 = arith.constant 0 : index
    %c0_7 = arith.constant 0 : index
    %8 = vector.load %arg4[%c0_6, %c0_7] : memref<32x128xf32, #tpu.memory_space<vmem>>, vector<32x128xf32>
    %cst_8 = arith.constant dense<0.000000e+00> : vector<8x128xf32>
    %9 = tpu.matmul %7, %8, %cst_8 {dimension_numbers = #tpu.dot_dimension_numbers<[1], [0], [0], [1], [0, 0, 1, 1], [], []>} : vector<8x32xf32>, vector<32x128xf32>, vector<8x128xf32> -> vector<8x128xf32>
    %c0_9 = arith.constant 0 : index
    %c0_10 = arith.constant 0 : index
    %10 = vector.load %arg5[%c0_9, %c0_10] : memref<1x128xf32, #tpu.memory_space<vmem>>, vector<1x128xf32>
    %11 = vector.broadcast %10 : vector<1x128xf32> to vector<8x128xf32>
    %12 = arith.addf %9, %11 : vector<8x128xf32>
    %c0_11 = arith.constant 0 : index
    %c0_12 = arith.constant 0 : index
    %13 = vector.load %arg6[%c0_11, %c0_12] : memref<8x128xf32, #tpu.memory_space<vmem>>, vector<8x128xf32>
    tpu.vector_store %arg6[%c0_11, %c0_12], %12 {strides = array<i32>} : memref<8x128xf32, #tpu.memory_space<vmem>>, vector<8x128xf32>,
    return
  }
  func.func @transform_0(%arg0: i32) -> (i32, i32) {
    %c0_i32 = arith.constant 0 : i32
    %c0_i32_0 = arith.constant 0 : i32
    return %arg0, %c0_i32 : i32, i32
  }
  func.func @transform_1(%arg0: i32) -> (i32, i32) {
    %c0_i32 = arith.constant 0 : i32
    %c0_i32_0 = arith.constant 0 : i32
    %c0_i32_1 = arith.constant 0 : i32
    return %c0_i32, %c0_i32_0 : i32, i32
  }
  func.func @transform_2(%arg0: i32) -> (i32, i32) {
    %c0_i32 = arith.constant 0 : i32
    %c0_i32_0 = arith.constant 0 : i32
    %c0_i32_1 = arith.constant 0 : i32
    return %c0_i32, %c0_i32_0 : i32, i32
  }
  func.func @transform_3(%arg0: i32) -> (i32, i32) {
    %c0_i32 = arith.constant 0 : i32
    %c0_i32_0 = arith.constant 0 : i32
    %c0_i32_1 = arith.constant 0 : i32
    return %c0_i32, %c0_i32_0 : i32, i32
  }
  func.func @transform_4(%arg0: i32) -> (i32, i32) {
    %c0_i32 = arith.constant 0 : i32
    %c0_i32_0 = arith.constant 0 : i32
    %c0_i32_1 = arith.constant 0 : i32
    return %c0_i32, %c0_i32_0 : i32, i32
  }
  func.func @transform_5(%arg0: i32) -> (i32, i32) {
    %c0_i32 = arith.constant 0 : i32
    %c0_i32_0 = arith.constant 0 : i32
    return %arg0, %c0_i32 : i32, i32
  }
}

</mosaic_0001>

<llo_original>
// kernel: tpu_custom_call.1
$region0: #{tpu_custom_call.1}
  #allocation0 [shape = 'u32[]', space=smem, size = 0x4, offset = 0x4, fixed_abs, tag = 'smem constant byte address 0x4 - core index']
  #allocation1 [shape = 'u32[144,128]{1,0:T(1,128)}', space=vmem, size = 0x12000, scoped, tag = 'internal scratch']
  %s0 = inlined_call_operand.hbm [shape: f32[8,32], index: 0, kind: input, shape index: {}]
  %s1 = inlined_call_operand.hbm [shape: f32[32,32], index: 1, kind: input, shape index: {}]
  %s2 = inlined_call_operand.vmem [shape: f32[1,32], index: 2, kind: input, shape index: {}]
  %s3 = inlined_call_operand.hbm [shape: f32[32,128], index: 3, kind: input, shape index: {}]
  %s4 = inlined_call_operand.vmem [shape: f32[1,128], index: 4, kind: input, shape index: {}]
  %s5 = inlined_call_operand.hbm [shape: f32[8,128], index: 5, kind: output, shape index: {}]
  %s6 = sld [smem:[#allocation0]]
  $region42: #{tpu_custom_call.1} parent=0
    _
  %s8 = ssub.s32 1, %s6
  %s9 = scalar_select 0, %s8, %s6
  $region1: #{tpu_custom_call.1} parent=0
    #allocation2 [shape = 'u8[4096]{0}', space=vmem, size = 0x1000, scoped, tag = 'input window, operand 0, single buffered']
    #allocation3 [shape = 's32[1]{0}', space=sflag, size = 0x4, scoped, tag = 'scoped memory for tpu_custom_call.1']
    #allocation4 [shape = 's32[1]{0}', space=sflag, size = 0x4, scoped, tag = 'scoped memory for tpu_custom_call.1']
    #allocation5 [shape = 'u8[16384]{0}', space=vmem, size = 0x4000, scoped, tag = 'input window, operand 1, single buffered']
    #allocation6 [shape = 's32[1]{0}', space=sflag, size = 0x4, scoped, tag = 'scoped memory for tpu_custom_call.1']
    #allocation7 [shape = 'u8[16384]{0}', space=vmem, size = 0x4000, scoped, tag = 'input window, operand 3, single buffered']
    #allocation8 [shape = 'u8[4096]{0}', space=vmem, size = 0x1000, scoped, tag = 'output window, operand 0, single buffered']
    %10 = vsyncpa [#allocation3], 0
    %11 = vsyncpa [#allocation6], 0
    %12 = vsyncpa [#allocation4], 0
    // Predicated region
    $region2: #{tpu_custom_call.1} parent=1 // pred_check
      _
    $region3: #{tpu_custom_call.1} parent=1 // pred_check_branch
      %14 = sbr.rel (0) target = $region5
    $region4: #{tpu_custom_call.1} parent=1 // pred_region
      %s16 = ssub.s32 128, 128
      %17 = vsyncadd [#allocation3], %s16
      %s19 = sshll.u32 [#allocation2], 4
      %s20 = int_to_ptr.vmem [resolvable:$true] %s19
      %22 = dma.hbm_to_vmem [thread:$0]  %s0, 128, %s20, [#allocation3]
    $region5: #{tpu_custom_call.1} parent=1 // pred_fallthru
      _
    // Predicated region
    $region6: #{tpu_custom_call.1} parent=1 // pred_check
      _
    $region7: #{tpu_custom_call.1} parent=1 // pred_check_branch
      %24 = sbr.rel (0) target = $region9
    $region8: #{tpu_custom_call.1} parent=1 // pred_region
      %s26 = ssub.s32 512, 512
      %27 = vsyncadd [#allocation6], %s26
      %s28 = sshll.u32 [#allocation5], 4
      %s29 = int_to_ptr.vmem [resolvable:$true] %s28
      %34 = dma.hbm_to_vmem [thread:$0]  %s1, 512, %s29, [#allocation6], 128, 128, 8
    $region9: #{tpu_custom_call.1} parent=1 // pred_fallthru
      _
    // Predicated region
    $region10: #{tpu_custom_call.1} parent=1 // pred_check
      _
    $region11: #{tpu_custom_call.1} parent=1 // pred_check_branch
      %36 = sbr.rel (0) target = $region13
    $region12: #{tpu_custom_call.1} parent=1 // pred_region
      _
    $region13: #{tpu_custom_call.1} parent=1 // pred_fallthru
      _
    // Predicated region
    $region14: #{tpu_custom_call.1} parent=1 // pred_check
      _
    $region15: #{tpu_custom_call.1} parent=1 // pred_check_branch
      %38 = sbr.rel (0) target = $region17
    $region16: #{tpu_custom_call.1} parent=1 // pred_region
      %s40 = ssub.s32 512, 512
      %41 = vsyncadd [#allocation6], %s40
      %s42 = sshll.u32 [#allocation7], 4
      %s43 = int_to_ptr.vmem [resolvable:$true] %s42
      %48 = dma.hbm_to_vmem [thread:$0]  %s3, 512, %s43, [#allocation6], 128, 128, 8
    $region17: #{tpu_custom_call.1} parent=1 // pred_fallthru
      _
    // Predicated region
    $region18: #{tpu_custom_call.1} parent=1 // pred_check
      _
    $region19: #{tpu_custom_call.1} parent=1 // pred_check_branch
      %50 = sbr.rel (0) target = $region21
    $region20: #{tpu_custom_call.1} parent=1 // pred_region
      _
    $region21: #{tpu_custom_call.1} parent=1 // pred_fallthru
      _
    // Predicated region
    $region22: #{tpu_custom_call.1} parent=1 // pred_check
      _
    $region23: #{tpu_custom_call.1} parent=1 // pred_check_branch
      %52 = sbr.rel (0) target = $region25
    $region24: #{tpu_custom_call.1} parent=1 // pred_region
      %53 = dma.done [#allocation3], 128
    $region25: #{tpu_custom_call.1} parent=1 // pred_fallthru
      _
    // Predicated region
    $region26: #{tpu_custom_call.1} parent=1 // pred_check
      _
    $region27: #{tpu_custom_call.1} parent=1 // pred_check_branch
      %55 = sbr.rel (0) target = $region29
    $region28: #{tpu_custom_call.1} parent=1 // pred_region
      %56 = dma.done [#allocation6], 512
    $region29: #{tpu_custom_call.1} parent=1 // pred_fallthru
      _
    // Predicated region
    $region30: #{tpu_custom_call.1} parent=1 // pred_check
      _
    $region31: #{tpu_custom_call.1} parent=1 // pred_check_branch
      %58 = sbr.rel (0) target = $region33
    $region32: #{tpu_custom_call.1} parent=1 // pred_region
      %59 = dma.done [#allocation6], 512
    $region33: #{tpu_custom_call.1} parent=1 // pred_fallthru
      _
    %v60 = vld [vmem:[#allocation2] sm:$0xff]
    %v61 = vld [vmem:[#allocation5] sm:$0xff]
    %v62 = vld [vmem:[#allocation5 + $0x8] sm:$0xff]
    %v63 = vld [vmem:[#allocation5 + $0x10] sm:$0xff]
    %v64 = vld [vmem:[#allocation5 + $0x18] sm:$0xff]
    %v65 = vld [vmem:[%s2] sm:$0x1]
    %v67 = vlaneseq
    %v68 = vshrl.u32 %v67, 7
    %v69 = vsub.s32 0, %v68
    %v70 = vrot.slane %v65, %v69
    %vm72 = vcmask 261120
    %v74 = vsel %vm72, %v60, 0
    %76 = vmatprep.subr.mxu0 0.0
    %77 = vmatpush1.msra.mxu0 0.0
    %78 = vmatprep.subr.mxu0 0.0
    %79 = vmatpush1.msra.mxu0 0.0
    %80 = vmatprep.subr.mxu0 0.0
    %81 = vmatpush1.msra.mxu0 0.0
    %82 = vmatprep.subr.mxu0 0.0
    %83 = vmatpush1.msra.mxu0 0.0
    %84 = vmatprep.subr.mxu0 0.0
    %85 = vmatpush1.msra.mxu0 0.0
    %86 = vmatprep.subr.mxu0 0.0
    %87 = vmatpush1.msra.mxu0 0.0
    %88 = vmatprep.subr.mxu0 0.0
    %89 = vmatpush1.msra.mxu0 0.0
    %90 = vmatprep.subr.mxu0 0.0
    %91 = vmatpush1.msra.mxu0 0.0
    %92 = vmatprep.subr.mxu0 0.0
    %93 = vmatpush1.msra.mxu0 0.0
    %94 = vmatprep.subr.mxu0 0.0
    %95 = vmatpush1.msra.mxu0 0.0
    %96 = vmatprep.subr.mxu0 0.0
    %97 = vmatpush1.msra.mxu0 0.0
    %98 = vmatprep.subr.mxu0 0.0
    %99 = vmatpush1.msra.mxu0 0.0
    %100 = vmatprep.subr.mxu0 0.0
    %101 = vmatpush1.msra.mxu0 %v64
    %102 = vmatprep.subr.mxu0 0.0
    %103 = vmatpush1.msra.mxu0 %v63
    %104 = vmatprep.subr.mxu0 0.0
    %105 = vmatpush1.msra.mxu0 %v62
    %106 = vmatprep.subr.mxu0 0.0
    %107 = vmatpush1.msra.mxu0 %v61
    %108 = vmatprep.subr.mxu0 0.0
    %109 = vmatpush2.msra.mxu0 0.0
    %110 = vmatprep.subr.mxu0 0.0
    %111 = vmatpush2.msra.mxu0 0.0
    %112 = vmatprep.subr.mxu0 0.0
    %113 = vmatpush2.msra.mxu0 0.0
    %114 = vmatprep.subr.mxu0 0.0
    %115 = vmatpush2.msra.mxu0 0.0
    %116 = vmatprep.subr.mxu0 0.0
    %117 = vmatpush2.msra.mxu0 0.0
    %118 = vmatprep.subr.mxu0 0.0
    %119 = vmatpush2.msra.mxu0 0.0
    %120 = vmatprep.subr.mxu0 0.0
    %121 = vmatpush2.msra.mxu0 0.0
    %122 = vmatprep.subr.mxu0 0.0
    %123 = vmatpush2.msra.mxu0 0.0
    %124 = vmatprep.subr.mxu0 0.0
    %125 = vmatpush2.msra.mxu0 0.0
    %126 = vmatprep.subr.mxu0 0.0
    %127 = vmatpush2.msra.mxu0 0.0
    %128 = vmatprep.subr.mxu0 0.0
    %129 = vmatpush2.msra.mxu0 0.0
    %130 = vmatprep.subr.mxu0 0.0
    %131 = vmatpush2.msra.mxu0 0.0
    %132 = vmatprep.subr.mxu0 0.0
    %133 = vmatpush2.msra.mxu0 0.0
    %134 = vmatprep.subr.mxu0 0.0
    %135 = vmatpush2.msra.mxu0 0.0
    %136 = vmatprep.subr.mxu0 0.0
    %137 = vmatpush2.msra.mxu0 0.0
    %138 = vmatprep.subr.mxu0 0.0
    %139 = vmatpush2.msra.mxu0 0.0
    %140 = vmatprep.mubr.f32.mxu0 0.0
    %141 = vmatmul.mubr.f32.gmra.mxu0 %v74
    %v142 = vpop.f32.mrf.mxu0
    %v143 = vadd.f32 %v70, %v142
    %v144 = vpop.f32.mrf.mxu0
    %145 = vdwg.mxu0
    %v146 = vmax.f32 %v143, 0.0
    %v147 = vld [vmem:[#allocation7] sm:$0xff]
    %v148 = vld [vmem:[#allocation7 + $0x8] sm:$0xff]
    %v149 = vld [vmem:[#allocation7 + $0x10] sm:$0xff]
    %v150 = vld [vmem:[#allocation7 + $0x18] sm:$0xff]
    %v151 = vld [vmem:[%s4] sm:$0x1]
    %v153 = vlaneseq
    %v154 = vshrl.u32 %v153, 7
    %v155 = vsub.s32 0, %v154
    %v156 = vrot.slane %v151, %v155
    %v159 = vsel %vm72, %v146, 0
    %161 = vmatprep.subr.mxu0 0.0
    %162 = vmatpush1.msra.mxu0 0.0
    %163 = vmatprep.subr.mxu0 0.0
    %164 = vmatpush1.msra.mxu0 0.0
    %165 = vmatprep.subr.mxu0 0.0
    %166 = vmatpush1.msra.mxu0 0.0
    %167 = vmatprep.subr.mxu0 0.0
    %168 = vmatpush1.msra.mxu0 0.0
    %169 = vmatprep.subr.mxu0 0.0
    %170 = vmatpush1.msra.mxu0 0.0
    %171 = vmatprep.subr.mxu0 0.0
    %172 = vmatpush1.msra.mxu0 0.0
    %173 = vmatprep.subr.mxu0 0.0
    %174 = vmatpush1.msra.mxu0 0.0
    %175 = vmatprep.subr.mxu0 0.0
    %176 = vmatpush1.msra.mxu0 0.0
    %177 = vmatprep.subr.mxu0 0.0
    %178 = vmatpush1.msra.mxu0 0.0
    %179 = vmatprep.subr.mxu0 0.0
    %180 = vmatpush1.msra.mxu0 0.0
    %181 = vmatprep.subr.mxu0 0.0
    %182 = vmatpush1.msra.mxu0 0.0
    %183 = vmatprep.subr.mxu0 0.0
    %184 = vmatpush1.msra.mxu0 0.0
    %185 = vmatprep.subr.mxu0 0.0
    %186 = vmatpush1.msra.mxu0 %v150
    %187 = vmatprep.subr.mxu0 0.0
    %188 = vmatpush1.msra.mxu0 %v149
    %189 = vmatprep.subr.mxu0 0.0
    %190 = vmatpush1.msra.mxu0 %v148
    %191 = vmatprep.subr.mxu0 0.0
    %192 = vmatpush1.msra.mxu0 %v147
    %193 = vmatprep.subr.mxu0 0.0
    %194 = vmatpush2.msra.mxu0 0.0
    %195 = vmatprep.subr.mxu0 0.0
    %196 = vmatpush2.msra.mxu0 0.0
    %197 = vmatprep.subr.mxu0 0.0
    %198 = vmatpush2.msra.mxu0 0.0
    %199 = vmatprep.subr.mxu0 0.0
    %200 = vmatpush2.msra.mxu0 0.0
    %201 = vmatprep.subr.mxu0 0.0
    %202 = vmatpush2.msra.mxu0 0.0
    %203 = vmatprep.subr.mxu0 0.0
    %204 = vmatpush2.msra.mxu0 0.0
    %205 = vmatprep.subr.mxu0 0.0
    %206 = vmatpush2.msra.mxu0 0.0
    %207 = vmatprep.subr.mxu0 0.0
    %208 = vmatpush2.msra.mxu0 0.0
    %209 = vmatprep.subr.mxu0 0.0
    %210 = vmatpush2.msra.mxu0 0.0
    %211 = vmatprep.subr.mxu0 0.0
    %212 = vmatpush2.msra.mxu0 0.0
    %213 = vmatprep.subr.mxu0 0.0
    %214 = vmatpush2.msra.mxu0 0.0
    %215 = vmatprep.subr.mxu0 0.0
    %216 = vmatpush2.msra.mxu0 0.0
    %217 = vmatprep.subr.mxu0 0.0
    %218 = vmatpush2.msra.mxu0 0.0
    %219 = vmatprep.subr.mxu0 0.0
    %220 = vmatpush2.msra.mxu0 0.0
    %221 = vmatprep.subr.mxu0 0.0
    %222 = vmatpush2.msra.mxu0 0.0
    %223 = vmatprep.subr.mxu0 0.0
    %224 = vmatpush2.msra.mxu0 0.0
    %225 = vmatprep.mubr.f32.mxu0 0.0
    %226 = vmatmul.mubr.f32.gmra.mxu0 %v159
    %v227 = vpop.f32.mrf.mxu0
    %v228 = vadd.f32 %v156, %v227
    %v229 = vpop.f32.mrf.mxu0
    %230 = vdwg.mxu0
    %231 = vst [vmem:[#allocation8] sm:$0xff] %v228
    // Predicated region
    $region34: #{tpu_custom_call.1} parent=1 // pred_check
      _
    $region35: #{tpu_custom_call.1} parent=1 // pred_check_branch
      %233 = sbr.rel (0) target = $region37
    $region36: #{tpu_custom_call.1} parent=1 // pred_region
      %s235 = ssub.s32 128, 128
      %236 = vsyncadd [#allocation4], %s235
      %s238 = sshll.u32 [#allocation8], 4
      %s239 = int_to_ptr.vmem [resolvable:$true] %s238
      %241 = dma.vmem_to_hbm [thread:$0]  %s239, 128, %s5, [#allocation4]
    $region37: #{tpu_custom_call.1} parent=1 // pred_fallthru
      _
    // Predicated region
    $region38: #{tpu_custom_call.1} parent=1 // pred_check
      _
    $region39: #{tpu_custom_call.1} parent=1 // pred_check_branch
      %243 = sbr.rel (0) target = $region41
    $region40: #{tpu_custom_call.1} parent=1 // pred_region
      %244 = dma.done [#allocation4], 128
    $region41: #{tpu_custom_call.1} parent=1 // pred_fallthru
      _
    %245 = vsyncpa [#allocation3], 1
    %246 = vsyncpa [#allocation6], 1
    %247 = vsyncpa [#allocation4], 1

</llo_original>
